<compile_context>
chip_gen: v7x
topology: tpu7x:2x2x1
jax: 0.10.0
libtpu: 0.0.40
codegen_flags: <defaults>
</compile_context>

<pallas_src>
import jax
import jax.numpy as jnp
from jax.experimental import pallas as pl
from jax.experimental.pallas import tpu as pltpu


def dqn_kernel(x_ref, w1_ref, b1_ref, w2_ref, b2_ref, w3_ref, b3_ref, o_ref):
    # Layer 1: Linear(state_len, 512) + ReLU. bf16 MXU operands, f32 accum,
    # bf16 epilogue (bias + ReLU) feeding straight into the next matmul.
    h1 = jnp.dot(x_ref[...], w1_ref[...], preferred_element_type=jnp.float32)
    h1 = jnp.maximum(h1.astype(jnp.bfloat16) + b1_ref[...], 0)
    # Layer 2: Linear(512, 512) + ReLU.
    h2 = jnp.dot(h1, w2_ref[...], preferred_element_type=jnp.float32)
    h2 = jnp.maximum(h2.astype(jnp.bfloat16) + b2_ref[...], 0)
    # Layer 3: Linear(512, n_pad) (lane-padded, no activation), f32 bias-add.
    out = jnp.dot(h2, w3_ref[...], preferred_element_type=jnp.float32)
    o_ref[...] = (out + b3_ref[...]).astype(o_ref.dtype)


def _num_tensorcores():
    """TensorCores per chip visible to one grid ('parallel' megacore sharding)."""
    try:
        kind = jax.devices()[0].device_kind.lower()
    except Exception:
        return 1
    # v7x (and v4/v5p megacore) have 2 TCs per chip; v5e/v6e have 1.
    return 2 if ("v7" in kind or "v4" in kind or "v5p" in kind) else 1


def _choose_batch_tile(batch, num_cores=1, max_tile=1024):
    """Large tiles amortize per-grid-step overhead; keep >= num_cores tiles so
    both v7x TensorCores get work; rows are a multiple of 8 (128 when big)."""
    tiles_wanted = max(num_cores, pl.cdiv(batch, max_tile))
    tb = pl.cdiv(batch, tiles_wanted)
    tb = ((tb + 7) // 8) * 8
    if tb >= 128:
        tb = ((tb + 127) // 128) * 128
    return max(8, min(tb, max_tile))


def prepare_params(params, hidden=512):
    """One-time parameter preprocessing (hoisted out of the per-call path):
    bf16 weight/bias casts and lane-padding of the last layer to 128 outputs."""
    n_actions = params["w3"].shape[1]
    n_pad = ((n_actions + 127) // 128) * 128
    w3p = jnp.zeros((hidden, n_pad), jnp.float32).at[:, :n_actions].set(params["w3"])
    b3p = jnp.zeros((1, n_pad), jnp.float32).at[:, :n_actions].set(params["b3"])
    return {
        "w1": params["w1"].astype(jnp.bfloat16),
        "b1": params["b1"].astype(jnp.bfloat16),
        "w2": params["w2"].astype(jnp.bfloat16),
        "b2": params["b2"].astype(jnp.bfloat16),
        "w3": w3p.astype(jnp.bfloat16),
        "b3": b3p,                      # final bias-add stays f32
        "n_actions": n_actions,
    }


def dqn_forward(state, prepared, *, batch_tile=None, return_padded=False):
    """state: [B, state_len] float. prepared: output of prepare_params()."""
    w1, b1 = prepared["w1"], prepared["b1"]
    w2, b2 = prepared["w2"], prepared["b2"]
    w3, b3 = prepared["w3"], prepared["b3"]
    n_actions = prepared["n_actions"]

    B, state_len = state.shape
    hidden = w1.shape[1]
    n_pad = w3.shape[1]

    # bf16 input: halves the input-tile DMA, matches MXU operand dtype.
    x = state.astype(jnp.bfloat16)

    num_cores = _num_tensorcores()
    tb = _choose_batch_tile(B, num_cores) if batch_tile is None else batch_tile
    nb = pl.cdiv(B, tb)
    # No explicit batch padding: every output row depends only on its own
    # input row, so the ragged last block's garbage rows are never written.

    # Cost / VMEM accounting.
    flops = 2 * B * (state_len * hidden + hidden * hidden + hidden * n_pad)
    weight_bytes = ((w1.size + w2.size + w3.size) * 2
                    + (b1.size + b2.size) * 2 + b3.size * 4)
    io_bytes = x.size * 2 + B * n_pad * 4
    bytes_accessed = int(weight_bytes + io_bytes)

    # Pallas double-buffers every input spec (incl. constant-index weights),
    # hence the 2x factors below. (Buffered(1) on the weights would halve
    # that, but the footprint is small enough not to matter.)
    vmem_bytes = (2 * weight_bytes
                  + 2 * tb * state_len * 2          # input tile (x2 buffers)
                  + 2 * tb * n_pad * 4              # output tile (x2 buffers)
                  + 2 * tb * hidden * 2             # h1 / h2 (bf16)
                  + 2 * tb * max(hidden, n_pad) * 4)  # f32 matmul accumulators
    vmem_limit = int(min(max(2 * vmem_bytes, 16 << 20), 64 << 20))

    out = pl.pallas_call(
        dqn_kernel,
        out_shape=jax.ShapeDtypeStruct((B, n_pad), jnp.float32),
        grid=(nb,),
        in_specs=[
            pl.BlockSpec((tb, state_len), lambda i: (i, 0)),      # state tile
            pl.BlockSpec((state_len, hidden), lambda i: (0, 0)),  # w1 (resident)
            pl.BlockSpec((1, hidden), lambda i: (0, 0)),          # b1 (resident)
            pl.BlockSpec((hidden, hidden), lambda i: (0, 0)),     # w2 (resident)
            pl.BlockSpec((1, hidden), lambda i: (0, 0)),          # b2 (resident)
            pl.BlockSpec((hidden, n_pad), lambda i: (0, 0)),      # w3 (resident)
            pl.BlockSpec((1, n_pad), lambda i: (0, 0)),           # b3 (resident)
        ],
        out_specs=pl.BlockSpec((tb, n_pad), lambda i: (i, 0)),
        compiler_params=pltpu.CompilerParams(
            dimension_semantics=("parallel",),
            vmem_limit_bytes=vmem_limit,
        ),
        cost_estimate=pl.CostEstimate(
            flops=flops, transcendentals=0, bytes_accessed=bytes_accessed),
    )(x, w1, b1, w2, b2, w3, b3)

    if return_padded:
        return out          # [B, n_pad] — caller can argmax over [:, :n_actions]
    return out[:, :n_actions]


def init_params(key, state_len, n_actions, hidden=512):
    """Deterministic synthetic init (PyTorch Linear default: U(-k, k), k=1/sqrt(fan_in))."""
    ks = jax.random.split(key, 6)

    def lin(kw, kb, fan_in, fan_out):
        bound = 1.0 / jnp.sqrt(fan_in)
        # stored transposed: [in, out]
        w = jax.random.uniform(kw, (fan_in, fan_out), jnp.float32, -bound, bound)
        b = jax.random.uniform(kb, (1, fan_out), jnp.float32, -bound, bound)
        return w, b

    w1, b1 = lin(ks[0], ks[1], state_len, hidden)
    w2, b2 = lin(ks[2], ks[3], hidden, hidden)
    w3, b3 = lin(ks[4], ks[5], hidden, n_actions)
    return {"w1": w1, "b1": b1, "w2": w2, "b2": b2, "w3": w3, "b3": b3}


def dqn_forward_ref(state, p):
    """f32 reference mirroring the kernel's bf16 rounding points."""
    bf = lambda a: a.astype(jnp.bfloat16)
    f32 = lambda a: a.astype(jnp.float32)
    hp = jax.lax.Precision.HIGHEST
    h1 = bf(jnp.dot(f32(bf(state)), f32(bf(p["w1"])), precision=hp)) + bf(p["b1"])
    h1 = jnp.maximum(h1, 0)
    h2 = bf(jnp.dot(f32(h1), f32(bf(p["w2"])), precision=hp)) + bf(p["b2"])
    h2 = jnp.maximum(h2, 0)
    return jnp.dot(f32(h2), f32(bf(p["w3"])), precision=hp) + p["b3"]


if __name__ == "__main__":
    key = jax.random.PRNGKey(0)
    k_param, k_state1, k_state2 = jax.random.split(key, 3)

    state_len = 32
    n_actions = 4
    params = init_params(k_param, state_len, n_actions, hidden=512)
    prepared = prepare_params(params, hidden=512)   # one-time preprocessing

    # Small-batch acting path (single grid step).
    batch = 8
    state = jax.random.normal(k_state1, (batch, state_len), jnp.float32)
    out = jax.block_until_ready(dqn_forward(state, prepared))
    ref = dqn_forward_ref(state, params)
    assert out.shape == (batch, n_actions)
    assert jnp.allclose(out, ref, atol=5e-3, rtol=5e-3)

    # Larger, non-multiple batch: exercises the batch grid, resident weights
    # and the ragged-last-tile path (no explicit padding).
    batch2 = 130
    state2 = jax.random.normal(k_state2, (batch2, state_len), jnp.float32)
    out2 = jax.block_until_ready(dqn_forward(state2, prepared))
    ref2 = dqn_forward_ref(state2, params)
    assert out2.shape == (batch2, n_actions)
    assert jnp.allclose(out2, ref2, atol=5e-3, rtol=5e-3)

    # TODO(synk): Adam optimizer, MSELoss and save/load are training/IO
    # machinery outside the forward pass and are not implemented here.
    print("KERNEL_OK")
</pallas_src>

<mosaic_0001>
module attributes {stable_mosaic.version = 11 : i64} {
  func.func @dqn_kernel(%arg0: i32, %arg1: memref<8x32xbf16, #tpu.memory_space<vmem>>, %arg2: memref<32x512xbf16, #tpu.memory_space<vmem>>, %arg3: memref<1x512xbf16, #tpu.memory_space<vmem>>, %arg4: memref<512x512xbf16, #tpu.memory_space<vmem>>, %arg5: memref<1x512xbf16, #tpu.memory_space<vmem>>, %arg6: memref<512x128xbf16, #tpu.memory_space<vmem>>, %arg7: memref<1x128xf32, #tpu.memory_space<vmem>>, %arg8: memref<8x128xf32, #tpu.memory_space<vmem>>) attributes {dimension_semantics = [#tpu.dimension_semantics<parallel>], iteration_bounds = array<i64: 1>, scalar_prefetch = 0 : i64, scratch_operands = 0 : i64, tpu.core_type = #tpu.core_type<tc>, window_params = [{transform_indices = @transform_0, window_bounds = array<i64: 8, 32>}, {pipeline_mode = #tpu.pipeline_mode<synchronous>, transform_indices = @transform_1, window_bounds = array<i64: 32, 512>}, {pipeline_mode = #tpu.pipeline_mode<synchronous>, transform_indices = @transform_2, window_bounds = array<i64: 1, 512>}, {pipeline_mode = #tpu.pipeline_mode<synchronous>, transform_indices = @transform_3, window_bounds = array<i64: 512, 512>}, {pipeline_mode = #tpu.pipeline_mode<synchronous>, transform_indices = @transform_4, window_bounds = array<i64: 1, 512>}, {pipeline_mode = #tpu.pipeline_mode<synchronous>, transform_indices = @transform_5, window_bounds = array<i64: 512, 128>}, {pipeline_mode = #tpu.pipeline_mode<synchronous>, transform_indices = @transform_6, window_bounds = array<i64: 1, 128>}, {transform_indices = @transform_7, window_bounds = array<i64: 8, 128>}]} {
    %c0 = arith.constant 0 : index
    %c0_0 = arith.constant 0 : index
    %0 = vector.load %arg1[%c0, %c0_0] : memref<8x32xbf16, #tpu.memory_space<vmem>>, vector<8x32xbf16>
    %c0_1 = arith.constant 0 : index
    %c0_2 = arith.constant 0 : index
    %1 = vector.load %arg2[%c0_1, %c0_2] : memref<32x512xbf16, #tpu.memory_space<vmem>>, vector<32x512xbf16>
    %cst = arith.constant dense<0.000000e+00> : vector<8x512xf32>
    %2 = tpu.matmul %0, %1, %cst {dimension_numbers = #tpu.dot_dimension_numbers<[1], [0], [0], [1], [0, 0, 1, 1], [], []>} : vector<8x32xbf16>, vector<32x512xbf16>, vector<8x512xf32> -> vector<8x512xf32>
    %3 = arith.truncf %2 : vector<8x512xf32> to vector<8x512xbf16>
    %c0_3 = arith.constant 0 : index
    %c0_4 = arith.constant 0 : index
    %4 = vector.load %arg3[%c0_3, %c0_4] : memref<1x512xbf16, #tpu.memory_space<vmem>>, vector<1x512xbf16>
    %5 = vector.broadcast %4 : vector<1x512xbf16> to vector<8x512xbf16>
    %6 = arith.addf %3, %5 : vector<8x512xbf16>
    %cst_5 = arith.constant 0.000000e+00 : bf16
    %7 = vector.broadcast %cst_5 : bf16 to vector<8x512xbf16>
    %8 = arith.maximumf %6, %7 : vector<8x512xbf16>
    %c0_6 = arith.constant 0 : index
    %c0_7 = arith.constant 0 : index
    %9 = vector.load %arg4[%c0_6, %c0_7] : memref<512x512xbf16, #tpu.memory_space<vmem>>, vector<512x512xbf16>
    %cst_8 = arith.constant dense<0.000000e+00> : vector<8x512xf32>
    %10 = tpu.matmul %8, %9, %cst_8 {dimension_numbers = #tpu.dot_dimension_numbers<[1], [0], [0], [1], [0, 0, 1, 1], [], []>} : vector<8x512xbf16>, vector<512x512xbf16>, vector<8x512xf32> -> vector<8x512xf32>
    %11 = arith.truncf %10 : vector<8x512xf32> to vector<8x512xbf16>
    %c0_9 = arith.constant 0 : index
    %c0_10 = arith.constant 0 : index
    %12 = vector.load %arg5[%c0_9, %c0_10] : memref<1x512xbf16, #tpu.memory_space<vmem>>, vector<1x512xbf16>
    %13 = vector.broadcast %12 : vector<1x512xbf16> to vector<8x512xbf16>
    %14 = arith.addf %11, %13 : vector<8x512xbf16>
    %cst_11 = arith.constant 0.000000e+00 : bf16
    %15 = vector.broadcast %cst_11 : bf16 to vector<8x512xbf16>
    %16 = arith.maximumf %14, %15 : vector<8x512xbf16>
    %c0_12 = arith.constant 0 : index
    %c0_13 = arith.constant 0 : index
    %17 = vector.load %arg6[%c0_12, %c0_13] : memref<512x128xbf16, #tpu.memory_space<vmem>>, vector<512x128xbf16>
    %cst_14 = arith.constant dense<0.000000e+00> : vector<8x128xf32>
    %18 = tpu.matmul %16, %17, %cst_14 {dimension_numbers = #tpu.dot_dimension_numbers<[1], [0], [0], [1], [0, 0, 1, 1], [], []>} : vector<8x512xbf16>, vector<512x128xbf16>, vector<8x128xf32> -> vector<8x128xf32>
    %c0_15 = arith.constant 0 : index
    %c0_16 = arith.constant 0 : index
    %19 = vector.load %arg7[%c0_15, %c0_16] : memref<1x128xf32, #tpu.memory_space<vmem>>, vector<1x128xf32>
    %20 = vector.broadcast %19 : vector<1x128xf32> to vector<8x128xf32>
    %21 = arith.addf %18, %20 : vector<8x128xf32>
    %c0_17 = arith.constant 0 : index
    %c0_18 = arith.constant 0 : index
    %22 = vector.load %arg8[%c0_17, %c0_18] : memref<8x128xf32, #tpu.memory_space<vmem>>, vector<8x128xf32>
    tpu.vector_store %arg8[%c0_17, %c0_18], %21 {strides = array<i32>} : memref<8x128xf32, #tpu.memory_space<vmem>>, vector<8x128xf32>,
    return
  }
  func.func @transform_0(%arg0: i32) -> (i32, i32) {
    %c0_i32 = arith.constant 0 : i32
    %c0_i32_0 = arith.constant 0 : i32
    return %arg0, %c0_i32 : i32, i32
  }
  func.func @transform_1(%arg0: i32) -> (i32, i32) {
    %c0_i32 = arith.constant 0 : i32
    %c0_i32_0 = arith.constant 0 : i32
    %c0_i32_1 = arith.constant 0 : i32
    return %c0_i32, %c0_i32_0 : i32, i32
  }
  func.func @transform_2(%arg0: i32) -> (i32, i32) {
    %c0_i32 = arith.constant 0 : i32
    %c0_i32_0 = arith.constant 0 : i32
    %c0_i32_1 = arith.constant 0 : i32
    return %c0_i32, %c0_i32_0 : i32, i32
  }
  func.func @transform_3(%arg0: i32) -> (i32, i32) {
    %c0_i32 = arith.constant 0 : i32
    %c0_i32_0 = arith.constant 0 : i32
    %c0_i32_1 = arith.constant 0 : i32
    return %c0_i32, %c0_i32_0 : i32, i32
  }
  func.func @transform_4(%arg0: i32) -> (i32, i32) {
    %c0_i32 = arith.constant 0 : i32
    %c0_i32_0 = arith.constant 0 : i32
    %c0_i32_1 = arith.constant 0 : i32
    return %c0_i32, %c0_i32_0 : i32, i32
  }
  func.func @transform_5(%arg0: i32) -> (i32, i32) {
    %c0_i32 = arith.constant 0 : i32
    %c0_i32_0 = arith.constant 0 : i32
    %c0_i32_1 = arith.constant 0 : i32
    return %c0_i32, %c0_i32_0 : i32, i32
  }
  func.func @transform_6(%arg0: i32) -> (i32, i32) {
    %c0_i32 = arith.constant 0 : i32
    %c0_i32_0 = arith.constant 0 : i32
    %c0_i32_1 = arith.constant 0 : i32
    return %c0_i32, %c0_i32_0 : i32, i32
  }
  func.func @transform_7(%arg0: i32) -> (i32, i32) {
    %c0_i32 = arith.constant 0 : i32
    %c0_i32_0 = arith.constant 0 : i32
    return %arg0, %c0_i32 : i32, i32
  }
}

</mosaic_0001>

<llo_original>
// kernel: tpu_custom_call.1
$region0: #{tpu_custom_call.1}
  #allocation0 [shape = 'u32[]', space=smem, size = 0x4, offset = 0x4, fixed_abs, tag = 'smem constant byte address 0x4 - core index']
  #allocation1 [shape = 'u32[144,128]{1,0:T(1,128)}', space=vmem, size = 0x12000, scoped, tag = 'internal scratch']
  %s0 = inlined_call_operand.hbm [shape: bf16[8,32], index: 0, kind: input, shape index: {}]
  %s1 = inlined_call_operand.hbm [shape: bf16[32,512], index: 1, kind: input, shape index: {}]
  %s2 = inlined_call_operand.vmem [shape: bf16[1,512], index: 2, kind: input, shape index: {}]
  %s3 = inlined_call_operand.hbm [shape: bf16[512,512], index: 3, kind: input, shape index: {}]
  %s4 = inlined_call_operand.vmem [shape: bf16[1,512], index: 4, kind: input, shape index: {}]
  %s5 = inlined_call_operand.hbm [shape: bf16[512,128], index: 5, kind: input, shape index: {}]
  %s6 = inlined_call_operand.vmem [shape: f32[1,128], index: 6, kind: input, shape index: {}]
  %s7 = inlined_call_operand.hbm [shape: f32[8,128], index: 7, kind: output, shape index: {}]
  %s8 = sld [smem:[#allocation0]]
  $region54: #{tpu_custom_call.1} parent=0
    _
  %s10 = ssub.s32 1, %s8
  %s11 = scalar_select 0, %s10, %s8
  $region1: #{tpu_custom_call.1} parent=0
    #allocation2 [shape = 'u8[2048]{0}', space=vmem, size = 0x800, scoped, tag = 'input window, operand 0, single buffered']
    #allocation3 [shape = 's32[1]{0}', space=sflag, size = 0x4, scoped, tag = 'scoped memory for tpu_custom_call.1']
    #allocation4 [shape = 's32[1]{0}', space=sflag, size = 0x4, scoped, tag = 'scoped memory for tpu_custom_call.1']
    #allocation5 [shape = 'u8[32768]{0}', space=vmem, size = 0x8000, scoped, tag = 'input window, operand 1, single buffered']
    #allocation6 [shape = 's32[1]{0}', space=sflag, size = 0x4, scoped, tag = 'scoped memory for tpu_custom_call.1']
    #allocation7 [shape = 'u8[524288]{0}', space=vmem, size = 0x80000, scoped, tag = 'input window, operand 3, single buffered']
    #allocation8 [shape = 'u8[131072]{0}', space=vmem, size = 0x20000, scoped, tag = 'input window, operand 5, single buffered']
    #allocation9 [shape = 's32[1]{0}', space=sflag, size = 0x4, scoped, tag = 'scoped memory for tpu_custom_call.1']
    #allocation10 [shape = 'u8[4096]{0}', space=vmem, size = 0x1000, scoped, tag = 'output window, operand 0, single buffered']
    %12 = vsyncpa [#allocation3], 0
    %13 = vsyncpa [#allocation6], 0
    %14 = vsyncpa [#allocation9], 0
    %15 = vsyncpa [#allocation4], 0
    // Predicated region
    $region2: #{tpu_custom_call.1} parent=1 // pred_check
      _
    $region3: #{tpu_custom_call.1} parent=1 // pred_check_branch
      %17 = sbr.rel (0) target = $region5
    $region4: #{tpu_custom_call.1} parent=1 // pred_region
      %s19 = ssub.s32 64, 64
      %20 = vsyncadd [#allocation3], %s19
      %s22 = sshll.u32 [#allocation2], 4
      %s23 = int_to_ptr.vmem [resolvable:$true] %s22
      %25 = dma.hbm_to_vmem [thread:$0]  %s0, 64, %s23, [#allocation3]
    $region5: #{tpu_custom_call.1} parent=1 // pred_fallthru
      _
    // Predicated region
    $region6: #{tpu_custom_call.1} parent=1 // pred_check
      _
    $region7: #{tpu_custom_call.1} parent=1 // pred_check_branch
      %27 = sbr.rel (0) target = $region9
    $region8: #{tpu_custom_call.1} parent=1 // pred_region
      %s29 = ssub.s32 1024, 1024
      %30 = vsyncadd [#allocation6], %s29
      %s31 = sshll.u32 [#allocation5], 4
      %s32 = int_to_ptr.vmem [resolvable:$true] %s31
      %37 = dma.hbm_to_vmem [thread:$0]  %s1, 1024, %s32, [#allocation6], 256, 256, 16
    $region9: #{tpu_custom_call.1} parent=1 // pred_fallthru
      _
    // Predicated region
    $region10: #{tpu_custom_call.1} parent=1 // pred_check
      _
    $region11: #{tpu_custom_call.1} parent=1 // pred_check_branch
      %39 = sbr.rel (0) target = $region13
    $region12: #{tpu_custom_call.1} parent=1 // pred_region
      _
    $region13: #{tpu_custom_call.1} parent=1 // pred_fallthru
      _
    // Predicated region
    $region14: #{tpu_custom_call.1} parent=1 // pred_check
      _
    $region15: #{tpu_custom_call.1} parent=1 // pred_check_branch
      %41 = sbr.rel (0) target = $region17
    $region16: #{tpu_custom_call.1} parent=1 // pred_region
      %s43 = ssub.s32 16384, 16384
      %44 = vsyncadd [#allocation6], %s43
      %s45 = sshll.u32 [#allocation7], 4
      %s46 = int_to_ptr.vmem [resolvable:$true] %s45
      %51 = dma.hbm_to_vmem [thread:$0]  %s3, 16384, %s46, [#allocation6], 256, 256, 16
    $region17: #{tpu_custom_call.1} parent=1 // pred_fallthru
      _
    // Predicated region
    $region18: #{tpu_custom_call.1} parent=1 // pred_check
      _
    $region19: #{tpu_custom_call.1} parent=1 // pred_check_branch
      %53 = sbr.rel (0) target = $region21
    $region20: #{tpu_custom_call.1} parent=1 // pred_region
      _
    $region21: #{tpu_custom_call.1} parent=1 // pred_fallthru
      _
    // Predicated region
    $region22: #{tpu_custom_call.1} parent=1 // pred_check
      _
    $region23: #{tpu_custom_call.1} parent=1 // pred_check_branch
      %55 = sbr.rel (0) target = $region25
    $region24: #{tpu_custom_call.1} parent=1 // pred_region
      %s57 = ssub.s32 4096, 4096
      %58 = vsyncadd [#allocation9], %s57
      %s59 = sshll.u32 [#allocation8], 4
      %s60 = int_to_ptr.vmem [resolvable:$true] %s59
      %65 = dma.hbm_to_vmem [thread:$0]  %s5, 4096, %s60, [#allocation9], 64, 64, 4
    $region25: #{tpu_custom_call.1} parent=1 // pred_fallthru
      _
    // Predicated region
    $region26: #{tpu_custom_call.1} parent=1 // pred_check
      _
    $region27: #{tpu_custom_call.1} parent=1 // pred_check_branch
      %67 = sbr.rel (0) target = $region29
    $region28: #{tpu_custom_call.1} parent=1 // pred_region
      _
    $region29: #{tpu_custom_call.1} parent=1 // pred_fallthru
      _
    // Predicated region
    $region30: #{tpu_custom_call.1} parent=1 // pred_check
      _
    $region31: #{tpu_custom_call.1} parent=1 // pred_check_branch
      %69 = sbr.rel (0) target = $region33
    $region32: #{tpu_custom_call.1} parent=1 // pred_region
      %70 = dma.done [#allocation3], 64
    $region33: #{tpu_custom_call.1} parent=1 // pred_fallthru
      _
    // Predicated region
    $region34: #{tpu_custom_call.1} parent=1 // pred_check
      _
    $region35: #{tpu_custom_call.1} parent=1 // pred_check_branch
      %72 = sbr.rel (0) target = $region37
    $region36: #{tpu_custom_call.1} parent=1 // pred_region
      %73 = dma.done [#allocation6], 1024
    $region37: #{tpu_custom_call.1} parent=1 // pred_fallthru
      _
    // Predicated region
    $region38: #{tpu_custom_call.1} parent=1 // pred_check
      _
    $region39: #{tpu_custom_call.1} parent=1 // pred_check_branch
      %75 = sbr.rel (0) target = $region41
    $region40: #{tpu_custom_call.1} parent=1 // pred_region
      %76 = dma.done [#allocation6], 16384
    $region41: #{tpu_custom_call.1} parent=1 // pred_fallthru
      _
    // Predicated region
    $region42: #{tpu_custom_call.1} parent=1 // pred_check
      _
    $region43: #{tpu_custom_call.1} parent=1 // pred_check_branch
      %78 = sbr.rel (0) target = $region45
    $region44: #{tpu_custom_call.1} parent=1 // pred_region
      %79 = dma.done [#allocation9], 4096
    $region45: #{tpu_custom_call.1} parent=1 // pred_fallthru
      _
    %v81 = vld [vmem:[#allocation2] sm:$0xf]
    %v82 = vld [vmem:[#allocation5] sm:$0xff]
    %v83 = vld [vmem:[#allocation5 + $0x8] sm:$0xff]
    %v84 = vld [vmem:[#allocation5 + $0x10] sm:$0xff]
    %v85 = vld [vmem:[#allocation5 + $0x18] sm:$0xff]
    %v86 = vld [vmem:[#allocation5 + $0x20] sm:$0xff]
    %v87 = vld [vmem:[#allocation5 + $0x28] sm:$0xff]
    %v88 = vld [vmem:[#allocation5 + $0x30] sm:$0xff]
    %v89 = vld [vmem:[#allocation5 + $0x38] sm:$0xff]
    %v98 = vunpack.c.l.b16 %v82
    %v99 = vunpack.c.h.b16 %v82
    %v100 = vunpack.c.l.b16 %v83
    %v101 = vunpack.c.h.b16 %v83
    %v102 = vunpack.c.l.b16 %v84
    %v103 = vunpack.c.h.b16 %v84
    %v104 = vunpack.c.l.b16 %v85
    %v105 = vunpack.c.h.b16 %v85
    %v106 = vunpack.c.l.b16 %v86
    %v107 = vunpack.c.h.b16 %v86
    %v108 = vunpack.c.l.b16 %v87
    %v109 = vunpack.c.h.b16 %v87
    %v110 = vunpack.c.l.b16 %v88
    %v111 = vunpack.c.h.b16 %v88
    %v112 = vunpack.c.l.b16 %v89
    %v113 = vunpack.c.h.b16 %v89
    %v114 = vpack.c.b16 %v102, %v98
    %v115 = vpack.c.b16 %v103, %v99
    %v116 = vpack.c.b16 %v104, %v100
    %v117 = vpack.c.b16 %v105, %v101
    %v118 = vpack.c.b16 %v110, %v106
    %v119 = vpack.c.b16 %v111, %v107
    %v120 = vpack.c.b16 %v112, %v108
    %v121 = vpack.c.b16 %v113, %v109
    %vm130 = vcmask 261120
    %v132 = vsel %vm130, %v81, 0
    %134 = vmatprep.subr.bf16.mxu0 %v115
    %135 = vmatpush1.bf16.msra.mxu0 %v114
    %136 = vmatprep.subr.bf16.mxu0 %v119
    %137 = vmatpush1.bf16.msra.mxu0 %v118
    %138 = vmatprep.subr.bf16.mxu0 0
    %139 = vmatpush1.bf16.msra.mxu0 0
    %140 = vmatprep.subr.bf16.mxu0 0
    %141 = vmatpush1.bf16.msra.mxu0 0
    %142 = vmatprep.subr.bf16.mxu0 0
    %143 = vmatpush1.bf16.msra.mxu0 0
    %144 = vmatprep.subr.bf16.mxu0 0
    %145 = vmatpush1.bf16.msra.mxu0 0
    %146 = vmatprep.subr.bf16.mxu0 0
    %147 = vmatpush1.bf16.msra.mxu0 0
    %148 = vmatprep.subr.bf16.mxu0 0
    %149 = vmatpush1.bf16.msra.mxu0 0
    %150 = vmatprep.subr.bf16.mxu0 0
    %151 = vmatpush1.bf16.msra.mxu0 0
    %152 = vmatprep.subr.bf16.mxu0 0
    %153 = vmatpush1.bf16.msra.mxu0 0
    %154 = vmatprep.subr.bf16.mxu0 0
    %155 = vmatpush1.bf16.msra.mxu0 0
    %156 = vmatprep.subr.bf16.mxu0 0
    %157 = vmatpush1.bf16.msra.mxu0 0
    %158 = vmatprep.subr.bf16.mxu0 0
    %159 = vmatpush1.bf16.msra.mxu0 0
    %160 = vmatprep.subr.bf16.mxu0 0
    %161 = vmatpush1.bf16.msra.mxu0 0
    %162 = vmatprep.subr.bf16.mxu0 0
    %163 = vmatpush1.bf16.msra.mxu0 0
    %164 = vmatprep.subr.bf16.mxu0 0
    %165 = vmatpush1.bf16.msra.mxu0 0
    %166 = vmatprep.mubr.bf16.mxu0 0
    %167 = vmatmul.mubr.bf16.gmra.mrb[0].mxu0 %v132
    %v168 = vpop.f32.mrb[0].mxu0
    %v169 = vadd.f32 0.0, %v168
    %v170 = vpop.f32.mrb[0].mxu0
    %v171 = vadd.f32 0.0, %v170
    %v172 = vpop.f32.mrb[0].mxu0
    %v173 = vpop.f32.mrb[0].mxu0
    %174 = vdwg.mxu0
    %175 = vmatprep.subr.bf16.mxu0 %v117
    %176 = vmatpush1.bf16.msra.mxu0 %v116
    %177 = vmatprep.subr.bf16.mxu0 %v121
    %178 = vmatpush1.bf16.msra.mxu0 %v120
    %179 = vmatprep.subr.bf16.mxu0 0
    %180 = vmatpush1.bf16.msra.mxu0 0
    %181 = vmatprep.subr.bf16.mxu0 0
    %182 = vmatpush1.bf16.msra.mxu0 0
    %183 = vmatprep.subr.bf16.mxu0 0
    %184 = vmatpush1.bf16.msra.mxu0 0
    %185 = vmatprep.subr.bf16.mxu0 0
    %186 = vmatpush1.bf16.msra.mxu0 0
    %187 = vmatprep.subr.bf16.mxu0 0
    %188 = vmatpush1.bf16.msra.mxu0 0
    %189 = vmatprep.subr.bf16.mxu0 0
    %190 = vmatpush1.bf16.msra.mxu0 0
    %191 = vmatprep.subr.bf16.mxu0 0
    %192 = vmatpush1.bf16.msra.mxu0 0
    %193 = vmatprep.subr.bf16.mxu0 0
    %194 = vmatpush1.bf16.msra.mxu0 0
    %195 = vmatprep.subr.bf16.mxu0 0
    %196 = vmatpush1.bf16.msra.mxu0 0
    %197 = vmatprep.subr.bf16.mxu0 0
    %198 = vmatpush1.bf16.msra.mxu0 0
    %199 = vmatprep.subr.bf16.mxu0 0
    %200 = vmatpush1.bf16.msra.mxu0 0
    %201 = vmatprep.subr.bf16.mxu0 0
    %202 = vmatpush1.bf16.msra.mxu0 0
    %203 = vmatprep.subr.bf16.mxu0 0
    %204 = vmatpush1.bf16.msra.mxu0 0
    %205 = vmatprep.subr.bf16.mxu0 0
    %206 = vmatpush1.bf16.msra.mxu0 0
    %207 = vmatprep.mubr.bf16.mxu0 0
    %208 = vmatmul.mubr.bf16.gmra.mrb[0].mxu0 %v132
    %v209 = vpop.f32.mrb[0].mxu0
    %v210 = vadd.f32 0.0, %v209
    %v211 = vpop.f32.mrb[0].mxu0
    %v212 = vadd.f32 0.0, %v211
    %v213 = vpop.f32.mrb[0].mxu0
    %v214 = vpop.f32.mrb[0].mxu0
    %215 = vdwg.mxu0
    %v216 = vpack.c.bf16 %v169, %v169
    %v217 = vpack.c.bf16 %v171, %v171
    %v218 = vpack.c.bf16 %v210, %v210
    %v219 = vpack.c.bf16 %v212, %v212
    %v220 = vld [vmem:[%s2] sm:$0xf]
    %v223 = vunpack.c.l.s4 1966171168
    %v224 = vunpack.c.0.s8 %v223
    %v225 = vlaneseq
    %v226 = vshrl.u32 %v225, 7
    %v227 = vsub.s32 %v224, %v226
    %v228 = vrot.slane %v220, %v227
    %v229 = vcombine.high %v228, %v228
    %v231 = vunpack.c.l.s4 1966171168
    %v232 = vunpack.c.0.s8 %v231
    %v233 = vlaneseq
    %v234 = vshrl.u32 %v233, 7
    %v235 = vsub.s32 %v232, %v234
    %v236 = vrot.slane %v228, %v235
    %v238 = vunpack.c.l.s4 1966171168
    %v239 = vunpack.c.0.s8 %v238
    %v240 = vlaneseq
    %v241 = vshrl.u32 %v240, 7
    %v242 = vsub.s32 %v239, %v241
    %v243 = vrot.slane %v229, %v242
    %v244 = vcombine.high %v236, %v236
    %v245 = vcombine.high %v243, %v243
    %v247 = vpack.i.b16 %v236, %v236
    %v249 = vlaneseq
    %v250 = vshrl.u32 %v249, 7
    %v251 = vsub.s32 0, %v250
    %v252 = vrot.slane %v247, %v251
    %v254 = vpack.i.b16 %v243, %v243
    %v256 = vlaneseq
    %v257 = vshrl.u32 %v256, 7
    %v258 = vsub.s32 0, %v257
    %v259 = vrot.slane %v254, %v258
    %v261 = vpack.i.b16 %v244, %v244
    %v263 = vlaneseq
    %v264 = vshrl.u32 %v263, 7
    %v265 = vsub.s32 0, %v264
    %v266 = vrot.slane %v261, %v265
    %v268 = vpack.i.b16 %v245, %v245
    %v270 = vlaneseq
    %v271 = vshrl.u32 %v270, 7
    %v272 = vsub.s32 0, %v271
    %v273 = vrot.slane %v268, %v272
    %v274 = vadd.bf16 %v216, %v252
    %v275 = vadd.bf16 %v217, %v259
    %v276 = vadd.bf16 %v218, %v266
    %v277 = vadd.bf16 %v219, %v273
    %v278 = vmax.bf16 %v274, 0
    %v279 = vmax.bf16 %v275, 0
    %v280 = vmax.bf16 %v276, 0
    %v281 = vmax.bf16 %v277, 0
    %v282 = vld [vmem:[#allocation7] sm:$0xff]
    %v283 = vld [vmem:[#allocation7 + $0x8] sm:$0xff]
    %v284 = vld [vmem:[#allocation7 + $0x10] sm:$0xff]
    %v285 = vld [vmem:[#allocation7 + $0x18] sm:$0xff]
    %v286 = vld [vmem:[#allocation7 + $0x20] sm:$0xff]
    %v287 = vld [vmem:[#allocation7 + $0x28] sm:$0xff]
    %v288 = vld [vmem:[#allocation7 + $0x30] sm:$0xff]
    %v289 = vld [vmem:[#allocation7 + $0x38] sm:$0xff]
    %v290 = vld [vmem:[#allocation7 + $0x40] sm:$0xff]
    %v291 = vld [vmem:[#allocation7 + $0x48] sm:$0xff]
    %v292 = vld [vmem:[#allocation7 + $0x50] sm:$0xff]
    %v293 = vld [vmem:[#allocation7 + $0x58] sm:$0xff]
    %v294 = vld [vmem:[#allocation7 + $0x60] sm:$0xff]
    %v295 = vld [vmem:[#allocation7 + $0x68] sm:$0xff]
    %v296 = vld [vmem:[#allocation7 + $0x70] sm:$0xff]
    %v297 = vld [vmem:[#allocation7 + $0x78] sm:$0xff]
    %v298 = vld [vmem:[#allocation7 + $0x80] sm:$0xff]
    %v299 = vld [vmem:[#allocation7 + $0x88] sm:$0xff]
    %v300 = vld [vmem:[#allocation7 + $0x90] sm:$0xff]
    %v301 = vld [vmem:[#allocation7 + $0x98] sm:$0xff]
    %v302 = vld [vmem:[#allocation7 + $0xa0] sm:$0xff]
    %v303 = vld [vmem:[#allocation7 + $0xa8] sm:$0xff]
    %v304 = vld [vmem:[#allocation7 + $0xb0] sm:$0xff]
    %v305 = vld [vmem:[#allocation7 + $0xb8] sm:$0xff]
    %v306 = vld [vmem:[#allocation7 + $0xc0] sm:$0xff]
    %v307 = vld [vmem:[#allocation7 + $0xc8] sm:$0xff]
    %v308 = vld [vmem:[#allocation7 + $0xd0] sm:$0xff]
    %v309 = vld [vmem:[#allocation7 + $0xd8] sm:$0xff]
    %v310 = vld [vmem:[#allocation7 + $0xe0] sm:$0xff]
    %v311 = vld [vmem:[#allocation7 + $0xe8] sm:$0xff]
    %v312 = vld [vmem:[#allocation7 + $0xf0] sm:$0xff]
    %v313 = vld [vmem:[#allocation7 + $0xf8] sm:$0xff]
    %v314 = vld [vmem:[#allocation7 + $0x100] sm:$0xff]
    %v315 = vld [vmem:[#allocation7 + $0x108] sm:$0xff]
    %v316 = vld [vmem:[#allocation7 + $0x110] sm:$0xff]
    %v317 = vld [vmem:[#allocation7 + $0x118] sm:$0xff]
    %v318 = vld [vmem:[#allocation7 + $0x120] sm:$0xff]
    %v319 = vld [vmem:[#allocation7 + $0x128] sm:$0xff]
    %v320 = vld [vmem:[#allocation7 + $0x130] sm:$0xff]
    %v321 = vld [vmem:[#allocation7 + $0x138] sm:$0xff]
    %v322 = vld [vmem:[#allocation7 + $0x140] sm:$0xff]
    %v323 = vld [vmem:[#allocation7 + $0x148] sm:$0xff]
    %v324 = vld [vmem:[#allocation7 + $0x150] sm:$0xff]
    %v325 = vld [vmem:[#allocation7 + $0x158] sm:$0xff]
    %v326 = vld [vmem:[#allocation7 + $0x160] sm:$0xff]
    %v327 = vld [vmem:[#allocation7 + $0x168] sm:$0xff]
    %v328 = vld [vmem:[#allocation7 + $0x170] sm:$0xff]
    %v329 = vld [vmem:[#allocation7 + $0x178] sm:$0xff]
    %v330 = vld [vmem:[#allocation7 + $0x180] sm:$0xff]
    %v331 = vld [vmem:[#allocation7 + $0x188] sm:$0xff]
    %v332 = vld [vmem:[#allocation7 + $0x190] sm:$0xff]
    %v333 = vld [vmem:[#allocation7 + $0x198] sm:$0xff]
    %v334 = vld [vmem:[#allocation7 + $0x1a0] sm:$0xff]
    %v335 = vld [vmem:[#allocation7 + $0x1a8] sm:$0xff]
    %v336 = vld [vmem:[#allocation7 + $0x1b0] sm:$0xff]
    %v337 = vld [vmem:[#allocation7 + $0x1b8] sm:$0xff]
    %v338 = vld [vmem:[#allocation7 + $0x1c0] sm:$0xff]
    %v339 = vld [vmem:[#allocation7 + $0x1c8] sm:$0xff]
    %v340 = vld [vmem:[#allocation7 + $0x1d0] sm:$0xff]
    %v341 = vld [vmem:[#allocation7 + $0x1d8] sm:$0xff]
    %v342 = vld [vmem:[#allocation7 + $0x1e0] sm:$0xff]
    %v343 = vld [vmem:[#allocation7 + $0x1e8] sm:$0xff]
    %v344 = vld [vmem:[#allocation7 + $0x1f0] sm:$0xff]
    %v345 = vld [vmem:[#allocation7 + $0x1f8] sm:$0xff]
    %v346 = vld [vmem:[#allocation7 + $0x200] sm:$0xff]
    %v347 = vld [vmem:[#allocation7 + $0x208] sm:$0xff]
    %v348 = vld [vmem:[#allocation7 + $0x210] sm:$0xff]
    %v349 = vld [vmem:[#allocation7 + $0x218] sm:$0xff]
    %v350 = vld [vmem:[#allocation7 + $0x220] sm:$0xff]
    %v351 = vld [vmem:[#allocation7 + $0x228] sm:$0xff]
    %v352 = vld [vmem:[#allocation7 + $0x230] sm:$0xff]
    %v353 = vld [vmem:[#allocation7 + $0x238] sm:$0xff]
    %v354 = vld [vmem:[#allocation7 + $0x240] sm:$0xff]
    %v355 = vld [vmem:[#allocation7 + $0x248] sm:$0xff]
    %v356 = vld [vmem:[#allocation7 + $0x250] sm:$0xff]
    %v357 = vld [vmem:[#allocation7 + $0x258] sm:$0xff]
    %v358 = vld [vmem:[#allocation7 + $0x260] sm:$0xff]
    %v359 = vld [vmem:[#allocation7 + $0x268] sm:$0xff]
    %v360 = vld [vmem:[#allocation7 + $0x270] sm:$0xff]
    %v361 = vld [vmem:[#allocation7 + $0x278] sm:$0xff]
    %v362 = vld [vmem:[#allocation7 + $0x280] sm:$0xff]
    %v363 = vld [vmem:[#allocation7 + $0x288] sm:$0xff]
    %v364 = vld [vmem:[#allocation7 + $0x290] sm:$0xff]
    %v365 = vld [vmem:[#allocation7 + $0x298] sm:$0xff]
    %v366 = vld [vmem:[#allocation7 + $0x2a0] sm:$0xff]
    %v367 = vld [vmem:[#allocation7 + $0x2a8] sm:$0xff]
    %v368 = vld [vmem:[#allocation7 + $0x2b0] sm:$0xff]
    %v369 = vld [vmem:[#allocation7 + $0x2b8] sm:$0xff]
    %v370 = vld [vmem:[#allocation7 + $0x2c0] sm:$0xff]
    %v371 = vld [vmem:[#allocation7 + $0x2c8] sm:$0xff]
    %v372 = vld [vmem:[#allocation7 + $0x2d0] sm:$0xff]
    %v373 = vld [vmem:[#allocation7 + $0x2d8] sm:$0xff]
    %v374 = vld [vmem:[#allocation7 + $0x2e0] sm:$0xff]
    %v375 = vld [vmem:[#allocation7 + $0x2e8] sm:$0xff]
    %v376 = vld [vmem:[#allocation7 + $0x2f0] sm:$0xff]
    %v377 = vld [vmem:[#allocation7 + $0x2f8] sm:$0xff]
    %v378 = vld [vmem:[#allocation7 + $0x300] sm:$0xff]
    %v379 = vld [vmem:[#allocation7 + $0x308] sm:$0xff]
    %v380 = vld [vmem:[#allocation7 + $0x310] sm:$0xff]
    %v381 = vld [vmem:[#allocation7 + $0x318] sm:$0xff]
    %v382 = vld [vmem:[#allocation7 + $0x320] sm:$0xff]
    %v383 = vld [vmem:[#allocation7 + $0x328] sm:$0xff]
    %v384 = vld [vmem:[#allocation7 + $0x330] sm:$0xff]
    %v385 = vld [vmem:[#allocation7 + $0x338] sm:$0xff]
    %v386 = vld [vmem:[#allocation7 + $0x340] sm:$0xff]
    %v387 = vld [vmem:[#allocation7 + $0x348] sm:$0xff]
    %v388 = vld [vmem:[#allocation7 + $0x350] sm:$0xff]
    %v389 = vld [vmem:[#allocation7 + $0x358] sm:$0xff]
    %v390 = vld [vmem:[#allocation7 + $0x360] sm:$0xff]
    %v391 = vld [vmem:[#allocation7 + $0x368] sm:$0xff]
    %v392 = vld [vmem:[#allocation7 + $0x370] sm:$0xff]
    %v393 = vld [vmem:[#allocation7 + $0x378] sm:$0xff]
    %v394 = vld [vmem:[#allocation7 + $0x380] sm:$0xff]
    %v395 = vld [vmem:[#allocation7 + $0x388] sm:$0xff]
    %v396 = vld [vmem:[#allocation7 + $0x390] sm:$0xff]
    %v397 = vld [vmem:[#allocation7 + $0x398] sm:$0xff]
    %v398 = vld [vmem:[#allocation7 + $0x3a0] sm:$0xff]
    %v399 = vld [vmem:[#allocation7 + $0x3a8] sm:$0xff]
    %v400 = vld [vmem:[#allocation7 + $0x3b0] sm:$0xff]
    %v401 = vld [vmem:[#allocation7 + $0x3b8] sm:$0xff]
    %v402 = vld [vmem:[#allocation7 + $0x3c0] sm:$0xff]
    %v403 = vld [vmem:[#allocation7 + $0x3c8] sm:$0xff]
    %v404 = vld [vmem:[#allocation7 + $0x3d0] sm:$0xff]
    %v405 = vld [vmem:[#allocation7 + $0x3d8] sm:$0xff]
    %v406 = vld [vmem:[#allocation7 + $0x3e0] sm:$0xff]
    %v407 = vld [vmem:[#allocation7 + $0x3e8] sm:$0xff]
    %v408 = vld [vmem:[#allocation7 + $0x3f0] sm:$0xff]
    %v409 = vld [vmem:[#allocation7 + $0x3f8] sm:$0xff]
    %v538 = vunpack.c.l.b16 %v282
    %v539 = vunpack.c.h.b16 %v282
    %v540 = vunpack.c.l.b16 %v283
    %v541 = vunpack.c.h.b16 %v283
    %v542 = vunpack.c.l.b16 %v284
    %v543 = vunpack.c.h.b16 %v284
    %v544 = vunpack.c.l.b16 %v285
    %v545 = vunpack.c.h.b16 %v285
    %v546 = vunpack.c.l.b16 %v286
    %v547 = vunpack.c.h.b16 %v286
    %v548 = vunpack.c.l.b16 %v287
    %v549 = vunpack.c.h.b16 %v287
    %v550 = vunpack.c.l.b16 %v288
    %v551 = vunpack.c.h.b16 %v288
    %v552 = vunpack.c.l.b16 %v289
    %v553 = vunpack.c.h.b16 %v289
    %v554 = vunpack.c.l.b16 %v290
    %v555 = vunpack.c.h.b16 %v290
    %v556 = vunpack.c.l.b16 %v291
    %v557 = vunpack.c.h.b16 %v291
    %v558 = vunpack.c.l.b16 %v292
    %v559 = vunpack.c.h.b16 %v292
    %v560 = vunpack.c.l.b16 %v293
    %v561 = vunpack.c.h.b16 %v293
    %v562 = vunpack.c.l.b16 %v294
    %v563 = vunpack.c.h.b16 %v294
    %v564 = vunpack.c.l.b16 %v295
    %v565 = vunpack.c.h.b16 %v295
    %v566 = vunpack.c.l.b16 %v296
    %v567 = vunpack.c.h.b16 %v296
    %v568 = vunpack.c.l.b16 %v297
    %v569 = vunpack.c.h.b16 %v297
    %v570 = vunpack.c.l.b16 %v298
    %v571 = vunpack.c.h.b16 %v298
    %v572 = vunpack.c.l.b16 %v299
    %v573 = vunpack.c.h.b16 %v299
    %v574 = vunpack.c.l.b16 %v300
    %v575 = vunpack.c.h.b16 %v300
    %v576 = vunpack.c.l.b16 %v301
    %v577 = vunpack.c.h.b16 %v301
    %v578 = vunpack.c.l.b16 %v302
    %v579 = vunpack.c.h.b16 %v302
    %v580 = vunpack.c.l.b16 %v303
    %v581 = vunpack.c.h.b16 %v303
    %v582 = vunpack.c.l.b16 %v304
    %v583 = vunpack.c.h.b16 %v304
    %v584 = vunpack.c.l.b16 %v305
    %v585 = vunpack.c.h.b16 %v305
    %v586 = vunpack.c.l.b16 %v306
    %v587 = vunpack.c.h.b16 %v306
    %v588 = vunpack.c.l.b16 %v307
    %v589 = vunpack.c.h.b16 %v307
    %v590 = vunpack.c.l.b16 %v308
    %v591 = vunpack.c.h.b16 %v308
    %v592 = vunpack.c.l.b16 %v309
    %v593 = vunpack.c.h.b16 %v309
    %v594 = vunpack.c.l.b16 %v310
    %v595 = vunpack.c.h.b16 %v310
    %v596 = vunpack.c.l.b16 %v311
    %v597 = vunpack.c.h.b16 %v311
    %v598 = vunpack.c.l.b16 %v312
    %v599 = vunpack.c.h.b16 %v312
    %v600 = vunpack.c.l.b16 %v313
    %v601 = vunpack.c.h.b16 %v313
    %v602 = vunpack.c.l.b16 %v314
    %v603 = vunpack.c.h.b16 %v314
    %v604 = vunpack.c.l.b16 %v315
    %v605 = vunpack.c.h.b16 %v315
    %v606 = vunpack.c.l.b16 %v316
    %v607 = vunpack.c.h.b16 %v316
    %v608 = vunpack.c.l.b16 %v317
    %v609 = vunpack.c.h.b16 %v317
    %v610 = vunpack.c.l.b16 %v318
    %v611 = vunpack.c.h.b16 %v318
    %v612 = vunpack.c.l.b16 %v319
    %v613 = vunpack.c.h.b16 %v319
    %v614 = vunpack.c.l.b16 %v320
    %v615 = vunpack.c.h.b16 %v320
    %v616 = vunpack.c.l.b16 %v321
    %v617 = vunpack.c.h.b16 %v321
    %v618 = vunpack.c.l.b16 %v322
    %v619 = vunpack.c.h.b16 %v322
    %v620 = vunpack.c.l.b16 %v323
    %v621 = vunpack.c.h.b16 %v323
    %v622 = vunpack.c.l.b16 %v324
    %v623 = vunpack.c.h.b16 %v324
    %v624 = vunpack.c.l.b16 %v325
    %v625 = vunpack.c.h.b16 %v325
    %v626 = vunpack.c.l.b16 %v326
    %v627 = vunpack.c.h.b16 %v326
    %v628 = vunpack.c.l.b16 %v327
    %v629 = vunpack.c.h.b16 %v327
    %v630 = vunpack.c.l.b16 %v328
    %v631 = vunpack.c.h.b16 %v328
    %v632 = vunpack.c.l.b16 %v329
    %v633 = vunpack.c.h.b16 %v329
    %v634 = vunpack.c.l.b16 %v330
    %v635 = vunpack.c.h.b16 %v330
    %v636 = vunpack.c.l.b16 %v331
    %v637 = vunpack.c.h.b16 %v331
    %v638 = vunpack.c.l.b16 %v332
    %v639 = vunpack.c.h.b16 %v332
    %v640 = vunpack.c.l.b16 %v333
    %v641 = vunpack.c.h.b16 %v333
    %v642 = vunpack.c.l.b16 %v334
    %v643 = vunpack.c.h.b16 %v334
    %v644 = vunpack.c.l.b16 %v335
    %v645 = vunpack.c.h.b16 %v335
    %v646 = vunpack.c.l.b16 %v336
    %v647 = vunpack.c.h.b16 %v336
    %v648 = vunpack.c.l.b16 %v337
    %v649 = vunpack.c.h.b16 %v337
    %v650 = vunpack.c.l.b16 %v338
    %v651 = vunpack.c.h.b16 %v338
    %v652 = vunpack.c.l.b16 %v339
    %v653 = vunpack.c.h.b16 %v339
    %v654 = vunpack.c.l.b16 %v340
    %v655 = vunpack.c.h.b16 %v340
    %v656 = vunpack.c.l.b16 %v341
    %v657 = vunpack.c.h.b16 %v341
    %v658 = vunpack.c.l.b16 %v342
    %v659 = vunpack.c.h.b16 %v342
    %v660 = vunpack.c.l.b16 %v343
    %v661 = vunpack.c.h.b16 %v343
    %v662 = vunpack.c.l.b16 %v344
    %v663 = vunpack.c.h.b16 %v344
    %v664 = vunpack.c.l.b16 %v345
    %v665 = vunpack.c.h.b16 %v345
    %v666 = vunpack.c.l.b16 %v346
    %v667 = vunpack.c.h.b16 %v346
    %v668 = vunpack.c.l.b16 %v347
    %v669 = vunpack.c.h.b16 %v347
    %v670 = vunpack.c.l.b16 %v348
    %v671 = vunpack.c.h.b16 %v348
    %v672 = vunpack.c.l.b16 %v349
    %v673 = vunpack.c.h.b16 %v349
    %v674 = vunpack.c.l.b16 %v350
    %v675 = vunpack.c.h.b16 %v350
    %v676 = vunpack.c.l.b16 %v351
    %v677 = vunpack.c.h.b16 %v351
    %v678 = vunpack.c.l.b16 %v352
    %v679 = vunpack.c.h.b16 %v352
    %v680 = vunpack.c.l.b16 %v353
    %v681 = vunpack.c.h.b16 %v353
    %v682 = vunpack.c.l.b16 %v354
    %v683 = vunpack.c.h.b16 %v354
    %v684 = vunpack.c.l.b16 %v355
    %v685 = vunpack.c.h.b16 %v355
    %v686 = vunpack.c.l.b16 %v356
    %v687 = vunpack.c.h.b16 %v356
    %v688 = vunpack.c.l.b16 %v357
    %v689 = vunpack.c.h.b16 %v357
    %v690 = vunpack.c.l.b16 %v358
    %v691 = vunpack.c.h.b16 %v358
    %v692 = vunpack.c.l.b16 %v359
    %v693 = vunpack.c.h.b16 %v359
    %v694 = vunpack.c.l.b16 %v360
    %v695 = vunpack.c.h.b16 %v360
    %v696 = vunpack.c.l.b16 %v361
    %v697 = vunpack.c.h.b16 %v361
    %v698 = vunpack.c.l.b16 %v362
    %v699 = vunpack.c.h.b16 %v362
    %v700 = vunpack.c.l.b16 %v363
    %v701 = vunpack.c.h.b16 %v363
    %v702 = vunpack.c.l.b16 %v364
    %v703 = vunpack.c.h.b16 %v364
    %v704 = vunpack.c.l.b16 %v365
    %v705 = vunpack.c.h.b16 %v365
    %v706 = vunpack.c.l.b16 %v366
    %v707 = vunpack.c.h.b16 %v366
    %v708 = vunpack.c.l.b16 %v367
    %v709 = vunpack.c.h.b16 %v367
    %v710 = vunpack.c.l.b16 %v368
    %v711 = vunpack.c.h.b16 %v368
    %v712 = vunpack.c.l.b16 %v369
    %v713 = vunpack.c.h.b16 %v369
    %v714 = vunpack.c.l.b16 %v370
    %v715 = vunpack.c.h.b16 %v370
    %v716 = vunpack.c.l.b16 %v371
    %v717 = vunpack.c.h.b16 %v371
    %v718 = vunpack.c.l.b16 %v372
    %v719 = vunpack.c.h.b16 %v372
    %v720 = vunpack.c.l.b16 %v373
    %v721 = vunpack.c.h.b16 %v373
    %v722 = vunpack.c.l.b16 %v374
    %v723 = vunpack.c.h.b16 %v374
    %v724 = vunpack.c.l.b16 %v375
    %v725 = vunpack.c.h.b16 %v375
    %v726 = vunpack.c.l.b16 %v376
    %v727 = vunpack.c.h.b16 %v376
    %v728 = vunpack.c.l.b16 %v377
    %v729 = vunpack.c.h.b16 %v377
    %v730 = vunpack.c.l.b16 %v378
    %v731 = vunpack.c.h.b16 %v378
    %v732 = vunpack.c.l.b16 %v379
    %v733 = vunpack.c.h.b16 %v379
    %v734 = vunpack.c.l.b16 %v380
    %v735 = vunpack.c.h.b16 %v380
    %v736 = vunpack.c.l.b16 %v381
    %v737 = vunpack.c.h.b16 %v381
    %v738 = vunpack.c.l.b16 %v382
    %v739 = vunpack.c.h.b16 %v382
    %v740 = vunpack.c.l.b16 %v383
    %v741 = vunpack.c.h.b16 %v383
    %v742 = vunpack.c.l.b16 %v384
    %v743 = vunpack.c.h.b16 %v384
    %v744 = vunpack.c.l.b16 %v385
    %v745 = vunpack.c.h.b16 %v385
    %v746 = vunpack.c.l.b16 %v386
    %v747 = vunpack.c.h.b16 %v386
    %v748 = vunpack.c.l.b16 %v387
    %v749 = vunpack.c.h.b16 %v387
    %v750 = vunpack.c.l.b16 %v388
    %v751 = vunpack.c.h.b16 %v388
    %v752 = vunpack.c.l.b16 %v389
    %v753 = vunpack.c.h.b16 %v389
    %v754 = vunpack.c.l.b16 %v390
    %v755 = vunpack.c.h.b16 %v390
    %v756 = vunpack.c.l.b16 %v391
    %v757 = vunpack.c.h.b16 %v391
    %v758 = vunpack.c.l.b16 %v392
    %v759 = vunpack.c.h.b16 %v392
    %v760 = vunpack.c.l.b16 %v393
    %v761 = vunpack.c.h.b16 %v393
    %v762 = vunpack.c.l.b16 %v394
    %v763 = vunpack.c.h.b16 %v394
    %v764 = vunpack.c.l.b16 %v395
    %v765 = vunpack.c.h.b16 %v395
    %v766 = vunpack.c.l.b16 %v396
    %v767 = vunpack.c.h.b16 %v396
    %v768 = vunpack.c.l.b16 %v397
    %v769 = vunpack.c.h.b16 %v397
    %v770 = vunpack.c.l.b16 %v398
    %v771 = vunpack.c.h.b16 %v398
    %v772 = vunpack.c.l.b16 %v399
    %v773 = vunpack.c.h.b16 %v399
    %v774 = vunpack.c.l.b16 %v400
    %v775 = vunpack.c.h.b16 %v400
    %v776 = vunpack.c.l.b16 %v401
    %v777 = vunpack.c.h.b16 %v401
    %v778 = vunpack.c.l.b16 %v402
    %v779 = vunpack.c.h.b16 %v402
    %v780 = vunpack.c.l.b16 %v403
    %v781 = vunpack.c.h.b16 %v403
    %v782 = vunpack.c.l.b16 %v404
    %v783 = vunpack.c.h.b16 %v404
    %v784 = vunpack.c.l.b16 %v405
    %v785 = vunpack.c.h.b16 %v405
    %v786 = vunpack.c.l.b16 %v406
    %v787 = vunpack.c.h.b16 %v406
    %v788 = vunpack.c.l.b16 %v407
    %v789 = vunpack.c.h.b16 %v407
    %v790 = vunpack.c.l.b16 %v408
    %v791 = vunpack.c.h.b16 %v408
    %v792 = vunpack.c.l.b16 %v409
    %v793 = vunpack.c.h.b16 %v409
    %v794 = vpack.c.b16 %v542, %v538
    %v795 = vpack.c.b16 %v543, %v539
    %v796 = vpack.c.b16 %v544, %v540
    %v797 = vpack.c.b16 %v545, %v541
    %v798 = vpack.c.b16 %v550, %v546
    %v799 = vpack.c.b16 %v551, %v547
    %v800 = vpack.c.b16 %v552, %v548
    %v801 = vpack.c.b16 %v553, %v549
    %v802 = vpack.c.b16 %v558, %v554
    %v803 = vpack.c.b16 %v559, %v555
    %v804 = vpack.c.b16 %v560, %v556
    %v805 = vpack.c.b16 %v561, %v557
    %v806 = vpack.c.b16 %v566, %v562
    %v807 = vpack.c.b16 %v567, %v563
    %v808 = vpack.c.b16 %v568, %v564
    %v809 = vpack.c.b16 %v569, %v565
    %v810 = vpack.c.b16 %v574, %v570
    %v811 = vpack.c.b16 %v575, %v571
    %v812 = vpack.c.b16 %v576, %v572
    %v813 = vpack.c.b16 %v577, %v573
    %v814 = vpack.c.b16 %v582, %v578
    %v815 = vpack.c.b16 %v583, %v579
    %v816 = vpack.c.b16 %v584, %v580
    %v817 = vpack.c.b16 %v585, %v581
    %v818 = vpack.c.b16 %v590, %v586
    %v819 = vpack.c.b16 %v591, %v587
    %v820 = vpack.c.b16 %v592, %v588
    %v821 = vpack.c.b16 %v593, %v589
    %v822 = vpack.c.b16 %v598, %v594
    %v823 = vpack.c.b16 %v599, %v595
    %v824 = vpack.c.b16 %v600, %v596
    %v825 = vpack.c.b16 %v601, %v597
    %v826 = vpack.c.b16 %v606, %v602
    %v827 = vpack.c.b16 %v607, %v603
    %v828 = vpack.c.b16 %v608, %v604
    %v829 = vpack.c.b16 %v609, %v605
    %v830 = vpack.c.b16 %v614, %v610
    %v831 = vpack.c.b16 %v615, %v611
    %v832 = vpack.c.b16 %v616, %v612
    %v833 = vpack.c.b16 %v617, %v613
    %v834 = vpack.c.b16 %v622, %v618
    %v835 = vpack.c.b16 %v623, %v619
    %v836 = vpack.c.b16 %v624, %v620
    %v837 = vpack.c.b16 %v625, %v621
    %v838 = vpack.c.b16 %v630, %v626
    %v839 = vpack.c.b16 %v631, %v627
    %v840 = vpack.c.b16 %v632, %v628
    %v841 = vpack.c.b16 %v633, %v629
    %v842 = vpack.c.b16 %v638, %v634
    %v843 = vpack.c.b16 %v639, %v635
    %v844 = vpack.c.b16 %v640, %v636
    %v845 = vpack.c.b16 %v641, %v637
    %v846 = vpack.c.b16 %v646, %v642
    %v847 = vpack.c.b16 %v647, %v643
    %v848 = vpack.c.b16 %v648, %v644
    %v849 = vpack.c.b16 %v649, %v645
    %v850 = vpack.c.b16 %v654, %v650
    %v851 = vpack.c.b16 %v655, %v651
    %v852 = vpack.c.b16 %v656, %v652
    %v853 = vpack.c.b16 %v657, %v653
    %v854 = vpack.c.b16 %v662, %v658
    %v855 = vpack.c.b16 %v663, %v659
    %v856 = vpack.c.b16 %v664, %v660
    %v857 = vpack.c.b16 %v665, %v661
    %v858 = vpack.c.b16 %v670, %v666
    %v859 = vpack.c.b16 %v671, %v667
    %v860 = vpack.c.b16 %v672, %v668
    %v861 = vpack.c.b16 %v673, %v669
    %v862 = vpack.c.b16 %v678, %v674
    %v863 = vpack.c.b16 %v679, %v675
    %v864 = vpack.c.b16 %v680, %v676
    %v865 = vpack.c.b16 %v681, %v677
    %v866 = vpack.c.b16 %v686, %v682
    %v867 = vpack.c.b16 %v687, %v683
    %v868 = vpack.c.b16 %v688, %v684
    %v869 = vpack.c.b16 %v689, %v685
    %v870 = vpack.c.b16 %v694, %v690
    %v871 = vpack.c.b16 %v695, %v691
    %v872 = vpack.c.b16 %v696, %v692
    %v873 = vpack.c.b16 %v697, %v693
    %v874 = vpack.c.b16 %v702, %v698
    %v875 = vpack.c.b16 %v703, %v699
    %v876 = vpack.c.b16 %v704, %v700
    %v877 = vpack.c.b16 %v705, %v701
    %v878 = vpack.c.b16 %v710, %v706
    %v879 = vpack.c.b16 %v711, %v707
    %v880 = vpack.c.b16 %v712, %v708
    %v881 = vpack.c.b16 %v713, %v709
    %v882 = vpack.c.b16 %v718, %v714
    %v883 = vpack.c.b16 %v719, %v715
    %v884 = vpack.c.b16 %v720, %v716
    %v885 = vpack.c.b16 %v721, %v717
    %v886 = vpack.c.b16 %v726, %v722
    %v887 = vpack.c.b16 %v727, %v723
    %v888 = vpack.c.b16 %v728, %v724
    %v889 = vpack.c.b16 %v729, %v725
    %v890 = vpack.c.b16 %v734, %v730
    %v891 = vpack.c.b16 %v735, %v731
    %v892 = vpack.c.b16 %v736, %v732
    %v893 = vpack.c.b16 %v737, %v733
    %v894 = vpack.c.b16 %v742, %v738
    %v895 = vpack.c.b16 %v743, %v739
    %v896 = vpack.c.b16 %v744, %v740
    %v897 = vpack.c.b16 %v745, %v741
    %v898 = vpack.c.b16 %v750, %v746
    %v899 = vpack.c.b16 %v751, %v747
    %v900 = vpack.c.b16 %v752, %v748
    %v901 = vpack.c.b16 %v753, %v749
    %v902 = vpack.c.b16 %v758, %v754
    %v903 = vpack.c.b16 %v759, %v755
    %v904 = vpack.c.b16 %v760, %v756
    %v905 = vpack.c.b16 %v761, %v757
    %v906 = vpack.c.b16 %v766, %v762
    %v907 = vpack.c.b16 %v767, %v763
    %v908 = vpack.c.b16 %v768, %v764
    %v909 = vpack.c.b16 %v769, %v765
    %v910 = vpack.c.b16 %v774, %v770
    %v911 = vpack.c.b16 %v775, %v771
    %v912 = vpack.c.b16 %v776, %v772
    %v913 = vpack.c.b16 %v777, %v773
    %v914 = vpack.c.b16 %v782, %v778
    %v915 = vpack.c.b16 %v783, %v779
    %v916 = vpack.c.b16 %v784, %v780
    %v917 = vpack.c.b16 %v785, %v781
    %v918 = vpack.c.b16 %v790, %v786
    %v919 = vpack.c.b16 %v791, %v787
    %v920 = vpack.c.b16 %v792, %v788
    %v921 = vpack.c.b16 %v793, %v789
    %1050 = vmatprep.subr.bf16.mxu0 %v795
    %1051 = vmatpush1.bf16.msra.mxu0 %v794
    %1052 = vmatprep.subr.bf16.mxu0 %v799
    %1053 = vmatpush1.bf16.msra.mxu0 %v798
    %1054 = vmatprep.subr.bf16.mxu0 %v803
    %1055 = vmatpush1.bf16.msra.mxu0 %v802
    %1056 = vmatprep.subr.bf16.mxu0 %v807
    %1057 = vmatpush1.bf16.msra.mxu0 %v806
    %1058 = vmatprep.subr.bf16.mxu0 %v811
    %1059 = vmatpush1.bf16.msra.mxu0 %v810
    %1060 = vmatprep.subr.bf16.mxu0 %v815
    %1061 = vmatpush1.bf16.msra.mxu0 %v814
    %1062 = vmatprep.subr.bf16.mxu0 %v819
    %1063 = vmatpush1.bf16.msra.mxu0 %v818
    %1064 = vmatprep.subr.bf16.mxu0 %v823
    %1065 = vmatpush1.bf16.msra.mxu0 %v822
    %1066 = vmatprep.subr.bf16.mxu0 %v827
    %1067 = vmatpush1.bf16.msra.mxu0 %v826
    %1068 = vmatprep.subr.bf16.mxu0 %v831
    %1069 = vmatpush1.bf16.msra.mxu0 %v830
    %1070 = vmatprep.subr.bf16.mxu0 %v835
    %1071 = vmatpush1.bf16.msra.mxu0 %v834
    %1072 = vmatprep.subr.bf16.mxu0 %v839
    %1073 = vmatpush1.bf16.msra.mxu0 %v838
    %1074 = vmatprep.subr.bf16.mxu0 %v843
    %1075 = vmatpush1.bf16.msra.mxu0 %v842
    %1076 = vmatprep.subr.bf16.mxu0 %v847
    %1077 = vmatpush1.bf16.msra.mxu0 %v846
    %1078 = vmatprep.subr.bf16.mxu0 %v851
    %1079 = vmatpush1.bf16.msra.mxu0 %v850
    %1080 = vmatprep.subr.bf16.mxu0 %v855
    %1081 = vmatpush1.bf16.msra.mxu0 %v854
    %1082 = vmatprep.mubr.bf16.mxu0 %v279
    %1083 = vmatmul.mubr.bf16.gmra.mrb[0].mxu0 %v278
    %v1084 = vpop.f32.mrb[0].mxu0
    %v1085 = vadd.f32 0.0, %v1084
    %v1086 = vpop.f32.mrb[0].mxu0
    %v1087 = vadd.f32 0.0, %v1086
    %v1088 = vpop.f32.mrb[0].mxu0
    %v1089 = vpop.f32.mrb[0].mxu0
    %1090 = vdwg.mxu0
    %1091 = vmatprep.subr.bf16.mxu0 %v859
    %1092 = vmatpush1.bf16.msra.mxu0 %v858
    %1093 = vmatprep.subr.bf16.mxu0 %v863
    %1094 = vmatpush1.bf16.msra.mxu0 %v862
    %1095 = vmatprep.subr.bf16.mxu0 %v867
    %1096 = vmatpush1.bf16.msra.mxu0 %v866
    %1097 = vmatprep.subr.bf16.mxu0 %v871
    %1098 = vmatpush1.bf16.msra.mxu0 %v870
    %1099 = vmatprep.subr.bf16.mxu0 %v875
    %1100 = vmatpush1.bf16.msra.mxu0 %v874
    %1101 = vmatprep.subr.bf16.mxu0 %v879
    %1102 = vmatpush1.bf16.msra.mxu0 %v878
    %1103 = vmatprep.subr.bf16.mxu0 %v883
    %1104 = vmatpush1.bf16.msra.mxu0 %v882
    %1105 = vmatprep.subr.bf16.mxu0 %v887
    %1106 = vmatpush1.bf16.msra.mxu0 %v886
    %1107 = vmatprep.subr.bf16.mxu0 %v891
    %1108 = vmatpush1.bf16.msra.mxu0 %v890
    %1109 = vmatprep.subr.bf16.mxu0 %v895
    %1110 = vmatpush1.bf16.msra.mxu0 %v894
    %1111 = vmatprep.subr.bf16.mxu0 %v899
    %1112 = vmatpush1.bf16.msra.mxu0 %v898
    %1113 = vmatprep.subr.bf16.mxu0 %v903
    %1114 = vmatpush1.bf16.msra.mxu0 %v902
    %1115 = vmatprep.subr.bf16.mxu0 %v907
    %1116 = vmatpush1.bf16.msra.mxu0 %v906
    %1117 = vmatprep.subr.bf16.mxu0 %v911
    %1118 = vmatpush1.bf16.msra.mxu0 %v910
    %1119 = vmatprep.subr.bf16.mxu0 %v915
    %1120 = vmatpush1.bf16.msra.mxu0 %v914
    %1121 = vmatprep.subr.bf16.mxu0 %v919
    %1122 = vmatpush1.bf16.msra.mxu0 %v918
    %1123 = vmatprep.mubr.bf16.mxu0 %v281
    %1124 = vmatmul.mubr.bf16.gmra.mrb[0].mxu0 %v280
    %v1125 = vpop.f32.mrb[0].mxu0
    %v1126 = vadd.f32 %v1085, %v1125
    %v1127 = vpop.f32.mrb[0].mxu0
    %v1128 = vadd.f32 %v1087, %v1127
    %v1129 = vpop.f32.mrb[0].mxu0
    %v1130 = vpop.f32.mrb[0].mxu0
    %1131 = vdwg.mxu0
    %1132 = vmatprep.subr.bf16.mxu0 %v797
    %1133 = vmatpush1.bf16.msra.mxu0 %v796
    %1134 = vmatprep.subr.bf16.mxu0 %v801
    %1135 = vmatpush1.bf16.msra.mxu0 %v800
    %1136 = vmatprep.subr.bf16.mxu0 %v805
    %1137 = vmatpush1.bf16.msra.mxu0 %v804
    %1138 = vmatprep.subr.bf16.mxu0 %v809
    %1139 = vmatpush1.bf16.msra.mxu0 %v808
    %1140 = vmatprep.subr.bf16.mxu0 %v813
    %1141 = vmatpush1.bf16.msra.mxu0 %v812
    %1142 = vmatprep.subr.bf16.mxu0 %v817
    %1143 = vmatpush1.bf16.msra.mxu0 %v816
    %1144 = vmatprep.subr.bf16.mxu0 %v821
    %1145 = vmatpush1.bf16.msra.mxu0 %v820
    %1146 = vmatprep.subr.bf16.mxu0 %v825
    %1147 = vmatpush1.bf16.msra.mxu0 %v824
    %1148 = vmatprep.subr.bf16.mxu0 %v829
    %1149 = vmatpush1.bf16.msra.mxu0 %v828
    %1150 = vmatprep.subr.bf16.mxu0 %v833
    %1151 = vmatpush1.bf16.msra.mxu0 %v832
    %1152 = vmatprep.subr.bf16.mxu0 %v837
    %1153 = vmatpush1.bf16.msra.mxu0 %v836
    %1154 = vmatprep.subr.bf16.mxu0 %v841
    %1155 = vmatpush1.bf16.msra.mxu0 %v840
    %1156 = vmatprep.subr.bf16.mxu0 %v845
    %1157 = vmatpush1.bf16.msra.mxu0 %v844
    %1158 = vmatprep.subr.bf16.mxu0 %v849
    %1159 = vmatpush1.bf16.msra.mxu0 %v848
    %1160 = vmatprep.subr.bf16.mxu0 %v853
    %1161 = vmatpush1.bf16.msra.mxu0 %v852
    %1162 = vmatprep.subr.bf16.mxu0 %v857
    %1163 = vmatpush1.bf16.msra.mxu0 %v856
    %1164 = vmatprep.mubr.bf16.mxu0 %v279
    %1165 = vmatmul.mubr.bf16.gmra.mrb[0].mxu0 %v278
    %v1166 = vpop.f32.mrb[0].mxu0
    %v1167 = vadd.f32 0.0, %v1166
    %v1168 = vpop.f32.mrb[0].mxu0
    %v1169 = vadd.f32 0.0, %v1168
    %v1170 = vpop.f32.mrb[0].mxu0
    %v1171 = vpop.f32.mrb[0].mxu0
    %1172 = vdwg.mxu0
    %1173 = vmatprep.subr.bf16.mxu0 %v861
    %1174 = vmatpush1.bf16.msra.mxu0 %v860
    %1175 = vmatprep.subr.bf16.mxu0 %v865
    %1176 = vmatpush1.bf16.msra.mxu0 %v864
    %1177 = vmatprep.subr.bf16.mxu0 %v869
    %1178 = vmatpush1.bf16.msra.mxu0 %v868
    %1179 = vmatprep.subr.bf16.mxu0 %v873
    %1180 = vmatpush1.bf16.msra.mxu0 %v872
    %1181 = vmatprep.subr.bf16.mxu0 %v877
    %1182 = vmatpush1.bf16.msra.mxu0 %v876
    %1183 = vmatprep.subr.bf16.mxu0 %v881
    %1184 = vmatpush1.bf16.msra.mxu0 %v880
    %1185 = vmatprep.subr.bf16.mxu0 %v885
    %1186 = vmatpush1.bf16.msra.mxu0 %v884
    %1187 = vmatprep.subr.bf16.mxu0 %v889
    %1188 = vmatpush1.bf16.msra.mxu0 %v888
    %1189 = vmatprep.subr.bf16.mxu0 %v893
    %1190 = vmatpush1.bf16.msra.mxu0 %v892
    %1191 = vmatprep.subr.bf16.mxu0 %v897
    %1192 = vmatpush1.bf16.msra.mxu0 %v896
    %1193 = vmatprep.subr.bf16.mxu0 %v901
    %1194 = vmatpush1.bf16.msra.mxu0 %v900
    %1195 = vmatprep.subr.bf16.mxu0 %v905
    %1196 = vmatpush1.bf16.msra.mxu0 %v904
    %1197 = vmatprep.subr.bf16.mxu0 %v909
    %1198 = vmatpush1.bf16.msra.mxu0 %v908
    %1199 = vmatprep.subr.bf16.mxu0 %v913
    %1200 = vmatpush1.bf16.msra.mxu0 %v912
    %1201 = vmatprep.subr.bf16.mxu0 %v917
    %1202 = vmatpush1.bf16.msra.mxu0 %v916
    %1203 = vmatprep.subr.bf16.mxu0 %v921
    %1204 = vmatpush1.bf16.msra.mxu0 %v920
    %1205 = vmatprep.mubr.bf16.mxu0 %v281
    %1206 = vmatmul.mubr.bf16.gmra.mrb[0].mxu0 %v280
    %v1207 = vpop.f32.mrb[0].mxu0
    %v1208 = vadd.f32 %v1167, %v1207
    %v1209 = vpop.f32.mrb[0].mxu0
    %v1210 = vadd.f32 %v1169, %v1209
    %v1211 = vpop.f32.mrb[0].mxu0
    %v1212 = vpop.f32.mrb[0].mxu0
    %1213 = vdwg.mxu0
    %v1214 = vpack.c.bf16 %v1126, %v1126
    %v1215 = vpack.c.bf16 %v1128, %v1128
    %v1216 = vpack.c.bf16 %v1208, %v1208
    %v1217 = vpack.c.bf16 %v1210, %v1210
    %v1218 = vld [vmem:[%s4] sm:$0xf]
    %v1221 = vunpack.c.l.s4 1966171168
    %v1222 = vunpack.c.0.s8 %v1221
    %v1223 = vlaneseq
    %v1224 = vshrl.u32 %v1223, 7
    %v1225 = vsub.s32 %v1222, %v1224
    %v1226 = vrot.slane %v1218, %v1225
    %v1227 = vcombine.high %v1226, %v1226
    %v1229 = vunpack.c.l.s4 1966171168
    %v1230 = vunpack.c.0.s8 %v1229
    %v1231 = vlaneseq
    %v1232 = vshrl.u32 %v1231, 7
    %v1233 = vsub.s32 %v1230, %v1232
    %v1234 = vrot.slane %v1226, %v1233
    %v1236 = vunpack.c.l.s4 1966171168
    %v1237 = vunpack.c.0.s8 %v1236
    %v1238 = vlaneseq
    %v1239 = vshrl.u32 %v1238, 7
    %v1240 = vsub.s32 %v1237, %v1239
    %v1241 = vrot.slane %v1227, %v1240
    %v1242 = vcombine.high %v1234, %v1234
    %v1243 = vcombine.high %v1241, %v1241
    %v1245 = vpack.i.b16 %v1234, %v1234
    %v1247 = vlaneseq
    %v1248 = vshrl.u32 %v1247, 7
    %v1249 = vsub.s32 0, %v1248
    %v1250 = vrot.slane %v1245, %v1249
    %v1252 = vpack.i.b16 %v1241, %v1241
    %v1254 = vlaneseq
    %v1255 = vshrl.u32 %v1254, 7
    %v1256 = vsub.s32 0, %v1255
    %v1257 = vrot.slane %v1252, %v1256
    %v1259 = vpack.i.b16 %v1242, %v1242
    %v1261 = vlaneseq
    %v1262 = vshrl.u32 %v1261, 7
    %v1263 = vsub.s32 0, %v1262
    %v1264 = vrot.slane %v1259, %v1263
    %v1266 = vpack.i.b16 %v1243, %v1243
    %v1268 = vlaneseq
    %v1269 = vshrl.u32 %v1268, 7
    %v1270 = vsub.s32 0, %v1269
    %v1271 = vrot.slane %v1266, %v1270
    %v1272 = vadd.bf16 %v1214, %v1250
    %v1273 = vadd.bf16 %v1215, %v1257
    %v1274 = vadd.bf16 %v1216, %v1264
    %v1275 = vadd.bf16 %v1217, %v1271
    %v1276 = vmax.bf16 %v1272, 0
    %v1277 = vmax.bf16 %v1273, 0
    %v1278 = vmax.bf16 %v1274, 0
    %v1279 = vmax.bf16 %v1275, 0
    %v1280 = vld [vmem:[#allocation8] sm:$0xf]
    %v1281 = vld [vmem:[#allocation8 + $0x4] sm:$0xf]
    %v1282 = vld [vmem:[#allocation8 + $0x8] sm:$0xf]
    %v1283 = vld [vmem:[#allocation8 + $0xc] sm:$0xf]
    %v1284 = vld [vmem:[#allocation8 + $0x10] sm:$0xf]
    %v1285 = vld [vmem:[#allocation8 + $0x14] sm:$0xf]
    %v1286 = vld [vmem:[#allocation8 + $0x18] sm:$0xf]
    %v1287 = vld [vmem:[#allocation8 + $0x1c] sm:$0xf]
    %v1288 = vld [vmem:[#allocation8 + $0x20] sm:$0xf]
    %v1289 = vld [vmem:[#allocation8 + $0x24] sm:$0xf]
    %v1290 = vld [vmem:[#allocation8 + $0x28] sm:$0xf]
    %v1291 = vld [vmem:[#allocation8 + $0x2c] sm:$0xf]
    %v1292 = vld [vmem:[#allocation8 + $0x30] sm:$0xf]
    %v1293 = vld [vmem:[#allocation8 + $0x34] sm:$0xf]
    %v1294 = vld [vmem:[#allocation8 + $0x38] sm:$0xf]
    %v1295 = vld [vmem:[#allocation8 + $0x3c] sm:$0xf]
    %v1296 = vld [vmem:[#allocation8 + $0x40] sm:$0xf]
    %v1297 = vld [vmem:[#allocation8 + $0x44] sm:$0xf]
    %v1298 = vld [vmem:[#allocation8 + $0x48] sm:$0xf]
    %v1299 = vld [vmem:[#allocation8 + $0x4c] sm:$0xf]
    %v1300 = vld [vmem:[#allocation8 + $0x50] sm:$0xf]
    %v1301 = vld [vmem:[#allocation8 + $0x54] sm:$0xf]
    %v1302 = vld [vmem:[#allocation8 + $0x58] sm:$0xf]
    %v1303 = vld [vmem:[#allocation8 + $0x5c] sm:$0xf]
    %v1304 = vld [vmem:[#allocation8 + $0x60] sm:$0xf]
    %v1305 = vld [vmem:[#allocation8 + $0x64] sm:$0xf]
    %v1306 = vld [vmem:[#allocation8 + $0x68] sm:$0xf]
    %v1307 = vld [vmem:[#allocation8 + $0x6c] sm:$0xf]
    %v1308 = vld [vmem:[#allocation8 + $0x70] sm:$0xf]
    %v1309 = vld [vmem:[#allocation8 + $0x74] sm:$0xf]
    %v1310 = vld [vmem:[#allocation8 + $0x78] sm:$0xf]
    %v1311 = vld [vmem:[#allocation8 + $0x7c] sm:$0xf]
    %v1312 = vld [vmem:[#allocation8 + $0x80] sm:$0xf]
    %v1313 = vld [vmem:[#allocation8 + $0x84] sm:$0xf]
    %v1314 = vld [vmem:[#allocation8 + $0x88] sm:$0xf]
    %v1315 = vld [vmem:[#allocation8 + $0x8c] sm:$0xf]
    %v1316 = vld [vmem:[#allocation8 + $0x90] sm:$0xf]
    %v1317 = vld [vmem:[#allocation8 + $0x94] sm:$0xf]
    %v1318 = vld [vmem:[#allocation8 + $0x98] sm:$0xf]
    %v1319 = vld [vmem:[#allocation8 + $0x9c] sm:$0xf]
    %v1320 = vld [vmem:[#allocation8 + $0xa0] sm:$0xf]
    %v1321 = vld [vmem:[#allocation8 + $0xa4] sm:$0xf]
    %v1322 = vld [vmem:[#allocation8 + $0xa8] sm:$0xf]
    %v1323 = vld [vmem:[#allocation8 + $0xac] sm:$0xf]
    %v1324 = vld [vmem:[#allocation8 + $0xb0] sm:$0xf]
    %v1325 = vld [vmem:[#allocation8 + $0xb4] sm:$0xf]
    %v1326 = vld [vmem:[#allocation8 + $0xb8] sm:$0xf]
    %v1327 = vld [vmem:[#allocation8 + $0xbc] sm:$0xf]
    %v1328 = vld [vmem:[#allocation8 + $0xc0] sm:$0xf]
    %v1329 = vld [vmem:[#allocation8 + $0xc4] sm:$0xf]
    %v1330 = vld [vmem:[#allocation8 + $0xc8] sm:$0xf]
    %v1331 = vld [vmem:[#allocation8 + $0xcc] sm:$0xf]
    %v1332 = vld [vmem:[#allocation8 + $0xd0] sm:$0xf]
    %v1333 = vld [vmem:[#allocation8 + $0xd4] sm:$0xf]
    %v1334 = vld [vmem:[#allocation8 + $0xd8] sm:$0xf]
    %v1335 = vld [vmem:[#allocation8 + $0xdc] sm:$0xf]
    %v1336 = vld [vmem:[#allocation8 + $0xe0] sm:$0xf]
    %v1337 = vld [vmem:[#allocation8 + $0xe4] sm:$0xf]
    %v1338 = vld [vmem:[#allocation8 + $0xe8] sm:$0xf]
    %v1339 = vld [vmem:[#allocation8 + $0xec] sm:$0xf]
    %v1340 = vld [vmem:[#allocation8 + $0xf0] sm:$0xf]
    %v1341 = vld [vmem:[#allocation8 + $0xf4] sm:$0xf]
    %v1342 = vld [vmem:[#allocation8 + $0xf8] sm:$0xf]
    %v1343 = vld [vmem:[#allocation8 + $0xfc] sm:$0xf]
    %v1344 = vld [vmem:[%s6] sm:$0x1]
    %v1346 = vlaneseq
    %v1347 = vshrl.u32 %v1346, 7
    %v1348 = vsub.s32 0, %v1347
    %v1349 = vrot.slane %v1344, %v1348
    %v1415 = vunpack.c.l.b16 %v1280
    %v1416 = vunpack.c.l.b16 %v1281
    %v1417 = vunpack.c.l.b16 %v1282
    %v1418 = vunpack.c.l.b16 %v1283
    %v1419 = vunpack.c.l.b16 %v1284
    %v1420 = vunpack.c.l.b16 %v1285
    %v1421 = vunpack.c.l.b16 %v1286
    %v1422 = vunpack.c.l.b16 %v1287
    %v1423 = vunpack.c.l.b16 %v1288
    %v1424 = vunpack.c.l.b16 %v1289
    %v1425 = vunpack.c.l.b16 %v1290
    %v1426 = vunpack.c.l.b16 %v1291
    %v1427 = vunpack.c.l.b16 %v1292
    %v1428 = vunpack.c.l.b16 %v1293
    %v1429 = vunpack.c.l.b16 %v1294
    %v1430 = vunpack.c.l.b16 %v1295
    %v1431 = vunpack.c.l.b16 %v1296
    %v1432 = vunpack.c.l.b16 %v1297
    %v1433 = vunpack.c.l.b16 %v1298
    %v1434 = vunpack.c.l.b16 %v1299
    %v1435 = vunpack.c.l.b16 %v1300
    %v1436 = vunpack.c.l.b16 %v1301
    %v1437 = vunpack.c.l.b16 %v1302
    %v1438 = vunpack.c.l.b16 %v1303
    %v1439 = vunpack.c.l.b16 %v1304
    %v1440 = vunpack.c.l.b16 %v1305
    %v1441 = vunpack.c.l.b16 %v1306
    %v1442 = vunpack.c.l.b16 %v1307
    %v1443 = vunpack.c.l.b16 %v1308
    %v1444 = vunpack.c.l.b16 %v1309
    %v1445 = vunpack.c.l.b16 %v1310
    %v1446 = vunpack.c.l.b16 %v1311
    %v1447 = vunpack.c.l.b16 %v1312
    %v1448 = vunpack.c.l.b16 %v1313
    %v1449 = vunpack.c.l.b16 %v1314
    %v1450 = vunpack.c.l.b16 %v1315
    %v1451 = vunpack.c.l.b16 %v1316
    %v1452 = vunpack.c.l.b16 %v1317
    %v1453 = vunpack.c.l.b16 %v1318
    %v1454 = vunpack.c.l.b16 %v1319
    %v1455 = vunpack.c.l.b16 %v1320
    %v1456 = vunpack.c.l.b16 %v1321
    %v1457 = vunpack.c.l.b16 %v1322
    %v1458 = vunpack.c.l.b16 %v1323
    %v1459 = vunpack.c.l.b16 %v1324
    %v1460 = vunpack.c.l.b16 %v1325
    %v1461 = vunpack.c.l.b16 %v1326
    %v1462 = vunpack.c.l.b16 %v1327
    %v1463 = vunpack.c.l.b16 %v1328
    %v1464 = vunpack.c.l.b16 %v1329
    %v1465 = vunpack.c.l.b16 %v1330
    %v1466 = vunpack.c.l.b16 %v1331
    %v1467 = vunpack.c.l.b16 %v1332
    %v1468 = vunpack.c.l.b16 %v1333
    %v1469 = vunpack.c.l.b16 %v1334
    %v1470 = vunpack.c.l.b16 %v1335
    %v1471 = vunpack.c.l.b16 %v1336
    %v1472 = vunpack.c.l.b16 %v1337
    %v1473 = vunpack.c.l.b16 %v1338
    %v1474 = vunpack.c.l.b16 %v1339
    %v1475 = vunpack.c.l.b16 %v1340
    %v1476 = vunpack.c.l.b16 %v1341
    %v1477 = vunpack.c.l.b16 %v1342
    %v1478 = vunpack.c.l.b16 %v1343
    %v1479 = vpack.c.b16 %v1416, %v1415
    %v1480 = vpack.c.b16 %v1418, %v1417
    %v1481 = vpack.c.b16 %v1420, %v1419
    %v1482 = vpack.c.b16 %v1422, %v1421
    %v1483 = vpack.c.b16 %v1424, %v1423
    %v1484 = vpack.c.b16 %v1426, %v1425
    %v1485 = vpack.c.b16 %v1428, %v1427
    %v1486 = vpack.c.b16 %v1430, %v1429
    %v1487 = vpack.c.b16 %v1432, %v1431
    %v1488 = vpack.c.b16 %v1434, %v1433
    %v1489 = vpack.c.b16 %v1436, %v1435
    %v1490 = vpack.c.b16 %v1438, %v1437
    %v1491 = vpack.c.b16 %v1440, %v1439
    %v1492 = vpack.c.b16 %v1442, %v1441
    %v1493 = vpack.c.b16 %v1444, %v1443
    %v1494 = vpack.c.b16 %v1446, %v1445
    %v1495 = vpack.c.b16 %v1448, %v1447
    %v1496 = vpack.c.b16 %v1450, %v1449
    %v1497 = vpack.c.b16 %v1452, %v1451
    %v1498 = vpack.c.b16 %v1454, %v1453
    %v1499 = vpack.c.b16 %v1456, %v1455
    %v1500 = vpack.c.b16 %v1458, %v1457
    %v1501 = vpack.c.b16 %v1460, %v1459
    %v1502 = vpack.c.b16 %v1462, %v1461
    %v1503 = vpack.c.b16 %v1464, %v1463
    %v1504 = vpack.c.b16 %v1466, %v1465
    %v1505 = vpack.c.b16 %v1468, %v1467
    %v1506 = vpack.c.b16 %v1470, %v1469
    %v1507 = vpack.c.b16 %v1472, %v1471
    %v1508 = vpack.c.b16 %v1474, %v1473
    %v1509 = vpack.c.b16 %v1476, %v1475
    %v1510 = vpack.c.b16 %v1478, %v1477
    %1543 = vmatprep.subr.bf16.mxu0 0
    %1544 = vmatpush1.bf16.msra.mxu0 %v1479
    %1545 = vmatprep.subr.bf16.mxu0 0
    %1546 = vmatpush1.bf16.msra.mxu0 %v1480
    %1547 = vmatprep.subr.bf16.mxu0 0
    %1548 = vmatpush1.bf16.msra.mxu0 %v1481
    %1549 = vmatprep.subr.bf16.mxu0 0
    %1550 = vmatpush1.bf16.msra.mxu0 %v1482
    %1551 = vmatprep.subr.bf16.mxu0 0
    %1552 = vmatpush1.bf16.msra.mxu0 %v1483
    %1553 = vmatprep.subr.bf16.mxu0 0
    %1554 = vmatpush1.bf16.msra.mxu0 %v1484
    %1555 = vmatprep.subr.bf16.mxu0 0
    %1556 = vmatpush1.bf16.msra.mxu0 %v1485
    %1557 = vmatprep.subr.bf16.mxu0 0
    %1558 = vmatpush1.bf16.msra.mxu0 %v1486
    %1559 = vmatprep.subr.bf16.mxu0 0
    %1560 = vmatpush1.bf16.msra.mxu0 %v1487
    %1561 = vmatprep.subr.bf16.mxu0 0
    %1562 = vmatpush1.bf16.msra.mxu0 %v1488
    %1563 = vmatprep.subr.bf16.mxu0 0
    %1564 = vmatpush1.bf16.msra.mxu0 %v1489
    %1565 = vmatprep.subr.bf16.mxu0 0
    %1566 = vmatpush1.bf16.msra.mxu0 %v1490
    %1567 = vmatprep.subr.bf16.mxu0 0
    %1568 = vmatpush1.bf16.msra.mxu0 %v1491
    %1569 = vmatprep.subr.bf16.mxu0 0
    %1570 = vmatpush1.bf16.msra.mxu0 %v1492
    %1571 = vmatprep.subr.bf16.mxu0 0
    %1572 = vmatpush1.bf16.msra.mxu0 %v1493
    %1573 = vmatprep.subr.bf16.mxu0 0
    %1574 = vmatpush1.bf16.msra.mxu0 %v1494
    %1575 = vmatprep.mubr.bf16.mxu0 %v1277
    %1576 = vmatmul.mubr.bf16.gmra.mrb[0].mxu0 %v1276
    %v1577 = vpop.f32.mrb[0].mxu0
    %v1578 = vadd.f32 %v1349, %v1577
    %v1579 = vpop.f32.mrb[0].mxu0
    %v1580 = vpop.f32.mrb[0].mxu0
    %v1581 = vpop.f32.mrb[0].mxu0
    %1582 = vdwg.mxu0
    %1583 = vmatprep.subr.bf16.mxu0 0
    %1584 = vmatpush1.bf16.msra.mxu0 %v1495
    %1585 = vmatprep.subr.bf16.mxu0 0
    %1586 = vmatpush1.bf16.msra.mxu0 %v1496
    %1587 = vmatprep.subr.bf16.mxu0 0
    %1588 = vmatpush1.bf16.msra.mxu0 %v1497
    %1589 = vmatprep.subr.bf16.mxu0 0
    %1590 = vmatpush1.bf16.msra.mxu0 %v1498
    %1591 = vmatprep.subr.bf16.mxu0 0
    %1592 = vmatpush1.bf16.msra.mxu0 %v1499
    %1593 = vmatprep.subr.bf16.mxu0 0
    %1594 = vmatpush1.bf16.msra.mxu0 %v1500
    %1595 = vmatprep.subr.bf16.mxu0 0
    %1596 = vmatpush1.bf16.msra.mxu0 %v1501
    %1597 = vmatprep.subr.bf16.mxu0 0
    %1598 = vmatpush1.bf16.msra.mxu0 %v1502
    %1599 = vmatprep.subr.bf16.mxu0 0
    %1600 = vmatpush1.bf16.msra.mxu0 %v1503
    %1601 = vmatprep.subr.bf16.mxu0 0
    %1602 = vmatpush1.bf16.msra.mxu0 %v1504
    %1603 = vmatprep.subr.bf16.mxu0 0
    %1604 = vmatpush1.bf16.msra.mxu0 %v1505
    %1605 = vmatprep.subr.bf16.mxu0 0
    %1606 = vmatpush1.bf16.msra.mxu0 %v1506
    %1607 = vmatprep.subr.bf16.mxu0 0
    %1608 = vmatpush1.bf16.msra.mxu0 %v1507
    %1609 = vmatprep.subr.bf16.mxu0 0
    %1610 = vmatpush1.bf16.msra.mxu0 %v1508
    %1611 = vmatprep.subr.bf16.mxu0 0
    %1612 = vmatpush1.bf16.msra.mxu0 %v1509
    %1613 = vmatprep.subr.bf16.mxu0 0
    %1614 = vmatpush1.bf16.msra.mxu0 %v1510
    %1615 = vmatprep.mubr.bf16.mxu0 %v1279
    %1616 = vmatmul.mubr.bf16.gmra.mrb[0].mxu0 %v1278
    %v1617 = vpop.f32.mrb[0].mxu0
    %v1618 = vadd.f32 %v1578, %v1617
    %v1619 = vpop.f32.mrb[0].mxu0
    %v1620 = vpop.f32.mrb[0].mxu0
    %v1621 = vpop.f32.mrb[0].mxu0
    %1622 = vdwg.mxu0
    %1623 = vst [vmem:[#allocation10] sm:$0xff] %v1618
    // Predicated region
    $region46: #{tpu_custom_call.1} parent=1 // pred_check
      _
    $region47: #{tpu_custom_call.1} parent=1 // pred_check_branch
      %1625 = sbr.rel (0) target = $region49
    $region48: #{tpu_custom_call.1} parent=1 // pred_region
      %s1627 = ssub.s32 128, 128
      %1628 = vsyncadd [#allocation4], %s1627
      %s1630 = sshll.u32 [#allocation10], 4
      %s1631 = int_to_ptr.vmem [resolvable:$true] %s1630
      %1633 = dma.vmem_to_hbm [thread:$0]  %s1631, 128, %s7, [#allocation4]
    $region49: #{tpu_custom_call.1} parent=1 // pred_fallthru
      _
    // Predicated region
    $region50: #{tpu_custom_call.1} parent=1 // pred_check
      _
    $region51: #{tpu_custom_call.1} parent=1 // pred_check_branch
      %1635 = sbr.rel (0) target = $region53
    $region52: #{tpu_custom_call.1} parent=1 // pred_region
      %1636 = dma.done [#allocation4], 128
    $region53: #{tpu_custom_call.1} parent=1 // pred_fallthru
      _
    %1637 = vsyncpa [#allocation3], 1
    %1638 = vsyncpa [#allocation6], 1
    %1639 = vsyncpa [#allocation9], 1
    %1640 = vsyncpa [#allocation4], 1

</llo_original>
